<compile_context>
chip_gen: v6e
topology: v6e:2x2x1
jax: 0.10.0
libtpu: 0.0.40
codegen_flags: <defaults>
</compile_context>

<pallas_src>
import math

import jax
import jax.numpy as jnp
from jax.experimental import pallas as pl
from jax.experimental.pallas import tpu as pltpu


# Per-block byte budget for the streaming (x) tile.  Input + output, each
# double-buffered, is then <= ~8 MiB of pipeline buffers — fits the default
# scoped VMEM limit on every generation (v5e 16 MiB, v6e/v7x 32 MiB) without
# raising vmem_limit_bytes.
_TARGET_BLOCK_BYTES = 2 * 1024 * 1024


def _drop_path_kernel(scale_ref, x_ref, o_ref):
    # scale_ref: (TB, 1) f32 block.  x_ref / o_ref: (TB, TL) block of x.
    # Broadcast multiply in f32, cast back to the activation dtype on store.
    o_ref[...] = (x_ref[...].astype(jnp.float32) * scale_ref[...]).astype(o_ref.dtype)


def _choose_tiles(B, L, itemsize):
    """Byte-budgeted, sublane/lane-dense block sizes legal under the (8,128) rule."""
    # Lane-axis tile: a multiple of 128 if we actually split L, else the full
    # extent (a full-extent block is always legal, even if L % 128 != 0).
    if L % 128 == 0 and L * itemsize > _TARGET_BLOCK_BYTES:
        TL = max(128, (_TARGET_BLOCK_BYTES // itemsize) // 128 * 128)
        TL = min(TL, L)
    else:
        TL = L

    # Batch-axis tile: pack rows up to the byte budget; keep it a multiple of
    # the dtype's sublane packing (8 for f32, 16 for bf16, 32 for int8) or
    # equal to the full batch dim.
    sub = max(8, 32 // max(1, itemsize))
    row_bytes = max(1, TL * itemsize)
    TB = max(1, _TARGET_BLOCK_BYTES // row_bytes)
    if TB >= B:
        TB = B
    else:
        TB = (TB // sub) * sub
        if TB < sub:
            TB = sub
        if TB > B:
            TB = B
    return TB, TL


def drop_path(x, drop_prob: float = 0.0, training: bool = False, *,
              key=None, seed=0, donate=False):
    """Pallas implementation of timm/PyTorch-style drop_path (forward)."""
    if drop_prob == 0.0 or not training:
        return x

    keep_prob = 1.0 - drop_prob
    orig_shape = x.shape
    B = x.shape[0]
    L = int(math.prod(x.shape[1:])) if x.ndim > 1 else 1

    # Per-sample floor(keep_prob + U[0,1)) mask and 1/keep_prob scale, computed
    # once in the wrapper (no in-kernel PRNG -> fully parallel grid).
    # TODO(synk): pass a fresh `key` each forward; the default fixed seed
    # repeats the same mask across calls (unlike PyTorch's fresh draws).
    if key is None:
        key = jax.random.PRNGKey(seed)
    u = jax.random.uniform(key, (B,), dtype=jnp.float32)
    mask = jnp.floor(jnp.float32(keep_prob) + u)
    if keep_prob > 0.0:
        scale = mask * jnp.float32(1.0 / keep_prob)
    else:
        # drop_prob == 1.0: everything dropped; avoid inf*0 -> NaN.
        scale = jnp.zeros((B,), dtype=jnp.float32)
    scale2 = scale.reshape(B, 1)

    # Lane-dense 2D layout; byte-budgeted sublane-dense blocks.
    x2 = x.reshape(B, L)
    itemsize = jnp.dtype(x.dtype).itemsize
    TB, TL = _choose_tiles(B, L, itemsize)
    grid = (pl.cdiv(B, TB), pl.cdiv(L, TL))

    out = pl.pallas_call(
        _drop_path_kernel,
        out_shape=jax.ShapeDtypeStruct((B, L), x.dtype),
        grid_spec=pltpu.PrefetchScalarGridSpec(
            num_scalar_prefetch=0,
            grid=grid,
            in_specs=[
                # (B,1) per-sample scale, blocked along batch only.
                pl.BlockSpec((TB, 1), lambda i, j: (i, 0)),
                # (B,L) activations, (TB,TL) sublane/lane-dense blocks.
                pl.BlockSpec((TB, TL), lambda i, j: (i, j)),
            ],
            out_specs=pl.BlockSpec((TB, TL), lambda i, j: (i, j)),
        ),
        compiler_params=pltpu.CompilerParams(
            # No reductions, no stateful PRNG -> both axes parallel
            # (lets v7x shard the grid across its two TensorCores).
            dimension_semantics=("parallel", "parallel"),
        ),
        # Optional buffer donation: x2 is input index 1.
        input_output_aliases=({1: 0} if donate else {}),
    )(scale2, x2)

    return out.reshape(orig_shape)


class DropPath:
    """Mirror of the PyTorch nn.Module (no parameters)."""

    def __init__(self, drop_prob=0.0):
        self.drop_prob = drop_prob
        self.training = True

    def __call__(self, x, seed=0, key=None):
        return drop_path(x, self.drop_prob, self.training, key=key, seed=seed)


if __name__ == "__main__":
    key = jax.random.PRNGKey(0)
    B, N, D = 2, 8, 32
    x = jax.random.normal(key, (B, N, D), dtype=jnp.float32)

    # eval mode / drop_prob==0 -> identity (no kernel launch, matches PyTorch)
    mod_eval = DropPath(drop_prob=0.5)
    mod_eval.training = False
    y_eval = jax.block_until_ready(mod_eval(x))
    assert jnp.allclose(y_eval, x)

    # training mode with drop_prob > 0 -> Pallas kernel
    mod = DropPath(drop_prob=0.5)
    y = jax.block_until_ready(mod(x, seed=123))
    assert y.shape == x.shape and y.dtype == x.dtype

    # each sample must be either all-zero (dropped) or x / keep_prob (kept)
    keep_prob = 1.0 - mod.drop_prob
    for b in range(B):
        zeroed = bool(jnp.all(y[b] == 0.0))
        scaled = bool(jnp.allclose(y[b], x[b] / keep_prob, atol=1e-5))
        assert zeroed or scaled, f"sample {b} is neither dropped nor scaled"

    # larger batch, lane-aligned L -> exercises multi-row (TB>1) blocks
    B2, L2 = 16, 1024
    x2 = jax.random.normal(jax.random.PRNGKey(1), (B2, L2), dtype=jnp.float32)
    y2 = jax.block_until_ready(drop_path(x2, 0.3, True, key=jax.random.PRNGKey(2)))
    for b in range(B2):
        zeroed = bool(jnp.all(y2[b] == 0.0))
        scaled = bool(jnp.allclose(y2[b], x2[b] / 0.7, atol=1e-5))
        assert zeroed or scaled, f"sample {b} (batch-16 case) wrong"

    # bf16 path (multiply in f32, cast on store)
    xb = x.astype(jnp.bfloat16)
    yb = jax.block_until_ready(drop_path(xb, 0.5, True, key=jax.random.PRNGKey(3)))
    assert yb.dtype == jnp.bfloat16 and yb.shape == xb.shape

    # drop_prob == 1.0 must give all zeros (no NaNs)
    mod_all = DropPath(drop_prob=1.0)
    y_all = jax.block_until_ready(mod_all(x, seed=7))
    assert bool(jnp.all(y_all == 0.0))

    print("KERNEL_OK")
</pallas_src>

<mosaic_0001>
module attributes {stable_mosaic.version = 11 : i64} {
  func.func @_drop_path_kernel(%arg0: i32, %arg1: i32, %arg2: memref<2x1xf32, #tpu.memory_space<vmem>>, %arg3: memref<2x256xf32, #tpu.memory_space<vmem>>, %arg4: memref<2x256xf32, #tpu.memory_space<vmem>>) attributes {dimension_semantics = [#tpu.dimension_semantics<parallel>, #tpu.dimension_semantics<parallel>], iteration_bounds = array<i64: 1, 1>, scalar_prefetch = 0 : i64, scratch_operands = 0 : i64, tpu.core_type = #tpu.core_type<tc>, window_params = [{transform_indices = @transform_0, window_bounds = array<i64: 2, 1>}, {transform_indices = @transform_1, window_bounds = array<i64: 2, 256>}, {transform_indices = @transform_2, window_bounds = array<i64: 2, 256>}]} {
    %c0 = arith.constant 0 : index
    %c0_0 = arith.constant 0 : index
    %0 = vector.load %arg3[%c0, %c0_0] : memref<2x256xf32, #tpu.memory_space<vmem>>, vector<2x256xf32>
    %c0_1 = arith.constant 0 : index
    %c0_2 = arith.constant 0 : index
    %1 = vector.load %arg2[%c0_1, %c0_2] : memref<2x1xf32, #tpu.memory_space<vmem>>, vector<2x1xf32>
    %2 = vector.broadcast %1 : vector<2x1xf32> to vector<2x256xf32>
    %3 = arith.mulf %0, %2 : vector<2x256xf32>
    %c0_3 = arith.constant 0 : index
    %c0_4 = arith.constant 0 : index
    %4 = vector.load %arg4[%c0_3, %c0_4] : memref<2x256xf32, #tpu.memory_space<vmem>>, vector<2x256xf32>
    tpu.vector_store %arg4[%c0_3, %c0_4], %3 {strides = array<i32>} : memref<2x256xf32, #tpu.memory_space<vmem>>, vector<2x256xf32>,
    return
  }
  func.func @transform_0(%arg0: i32, %arg1: i32) -> (i32, i32) {
    %c0_i32 = arith.constant 0 : i32
    %c0_i32_0 = arith.constant 0 : i32
    return %arg0, %c0_i32 : i32, i32
  }
  func.func @transform_1(%arg0: i32, %arg1: i32) -> (i32, i32) {
    %c0_i32 = arith.constant 0 : i32
    return %arg0, %arg1 : i32, i32
  }
  func.func @transform_2(%arg0: i32, %arg1: i32) -> (i32, i32) {
    %c0_i32 = arith.constant 0 : i32
    return %arg0, %arg1 : i32, i32
  }
}

</mosaic_0001>

<llo_original>
// kernel: tpu_custom_call.1
$region0: #{tpu_custom_call.1}
  #allocation0 [shape = 'u32[]', space=smem, size = 0x4, offset = 0x4, fixed_abs, tag = 'smem constant byte address 0x4 - core index']
  #allocation1 [shape = 'u32[144,128]{1,0:T(1,128)}', space=vmem, size = 0x12000, scoped, tag = 'internal scratch']
  %s0 = inlined_call_operand.vmem [shape: f32[2,1], index: 0, kind: input, shape index: {}]
  %s1 = inlined_call_operand.vmem [shape: f32[2,256], index: 1, kind: input, shape index: {}]
  %s2 = inlined_call_operand.hbm [shape: f32[2,256], index: 2, kind: output, shape index: {}]
  %s3 = sld [smem:[#allocation0]]
  $region18: #{tpu_custom_call.1} parent=0
    _
  %s5 = ssub.s32 1, %s3
  %s6 = scalar_select 0, %s5, %s3
  $region1: #{tpu_custom_call.1} parent=0
    #allocation2 [shape = 'u8[2048]{0}', space=vmem, size = 0x800, scoped, tag = 'output window, operand 0, single buffered']
    #allocation3 [shape = 's32[1]{0}', space=sflag, size = 0x4, scoped, tag = 'scoped memory for tpu_custom_call.1']
    %7 = vsyncpa [#allocation3], 0
    // Predicated region
    $region2: #{tpu_custom_call.1} parent=1 // pred_check
      _
    $region3: #{tpu_custom_call.1} parent=1 // pred_check_branch
      %9 = sbr.rel (0) target = $region5
    $region4: #{tpu_custom_call.1} parent=1 // pred_region
      _
    $region5: #{tpu_custom_call.1} parent=1 // pred_fallthru
      _
    // Predicated region
    $region6: #{tpu_custom_call.1} parent=1 // pred_check
      _
    $region7: #{tpu_custom_call.1} parent=1 // pred_check_branch
      %11 = sbr.rel (0) target = $region9
    $region8: #{tpu_custom_call.1} parent=1 // pred_region
      _
    $region9: #{tpu_custom_call.1} parent=1 // pred_fallthru
      _
    %v12 = vld [vmem:[%s1] sm:$0xf]
    %v13 = vld [vmem:[%s0] sm:$0x3]
    %15 = vset.pattern.permute.xlu0 0
    %16 = vperm.xlu0 %15, %v13
    %v17 = vpop.permute.xlu0 %16
    %v19 = vunpack.c.l.s4 269488144
    %v20 = vunpack.c.0.s8 %v19
    %v21 = vlaneseq
    %v22 = vshrl.u32 %v21, 7
    %v23 = vsub.s32 %v20, %v22
    %v24 = vrot.slane %v17, %v23
    %v26 = vmul.f32 %v12, %v24
    %27 = vst [vmem:[#allocation2] sm:$0xf] %v26
    // Predicated region
    $region10: #{tpu_custom_call.1} parent=1 // pred_check
      _
    $region11: #{tpu_custom_call.1} parent=1 // pred_check_branch
      %29 = sbr.rel (0) target = $region13
    $region12: #{tpu_custom_call.1} parent=1 // pred_region
      %s31 = ssub.s32 64, 64
      %32 = vsyncadd [#allocation3], %s31
      %s34 = sshll.u32 [#allocation2], 4
      %s35 = int_to_ptr.vmem [resolvable:$true] %s34
      %37 = dma.vmem_to_hbm [thread:$0]  %s35, 64, %s2, [#allocation3]
    $region13: #{tpu_custom_call.1} parent=1 // pred_fallthru
      _
    // Predicated region
    $region14: #{tpu_custom_call.1} parent=1 // pred_check
      _
    $region15: #{tpu_custom_call.1} parent=1 // pred_check_branch
      %39 = sbr.rel (0) target = $region17
    $region16: #{tpu_custom_call.1} parent=1 // pred_region
      %40 = dma.done [#allocation3], 64
    $region17: #{tpu_custom_call.1} parent=1 // pred_fallthru
      _
    %41 = vsyncpa [#allocation3], 1

</llo_original>
